<compile_context>
chip_gen: v6e
topology: v6e:2x2x1
jax: 0.10.0
libtpu: 0.0.40
codegen_flags: <defaults>
</compile_context>

<pallas_src>
import math
from functools import partial

import jax
import jax.numpy as jnp
from jax import lax
from jax.experimental import pallas as pl
from jax.experimental.pallas import tpu as pltpu

LANES = 128
TILE_BYTES = 2 * 1024 * 1024          # per input per pipeline buffer (~2 MiB)

# "parameters" of the Mix module: loss names + deterministic coefficients.
LOSS_NAMES = ("mse", "l1")
COEFFS = {"mse": 0.7, "l1": 0.3}


def _cdiv(a, b):
    return -(-a // b)


def _pack_rows(dtype):
    """Sublane-packing row granularity: 8 for f32, 16 for bf16, 32 for int8/fp8."""
    return 8 * max(1, 4 // jnp.dtype(dtype).itemsize)


def _num_splits():
    """Size of the leading 'parallel' grid axis.

    2 on chips whose jax device owns 2 TensorCores (v4/v5p megacore, v7x),
    1 on single-TC-per-device chips (v2/v3/v5e/v6e).  With the clamp-and-mask
    tiling below, an unnecessary split is nearly free, so unknown chips
    default to 2.
    """
    try:
        d = jax.local_devices()[0]
        nc = getattr(d, "num_cores", None)
        if isinstance(nc, int) and nc >= 1:
            return min(nc, 2)
        kind = str(getattr(d, "device_kind", "")).lower()
        for tag in ("v5 lite", "v5e", "v6 lite", "v6e", "v2", "v3"):
            if tag in kind:
                return 1
    except Exception:
        pass
    return 2


def _mix_partials_kernel(t_ref, p_ref, psq_ref, pabs_ref, acc_sq, acc_ab,
                         *, valid_rows, exact):
    """Grid = (n_split, n_tiles); axis 0 'parallel', axis 1 'arbitrary' (reduce).

    Each split accumulates its sum-of-squares / sum-of-abs partials in VMEM
    scratch and writes its (CH, WIDE) output block once, on its last step.
    `valid_rows` / `exact` are static Python values baked in via closure.
    """
    s = pl.program_id(0)
    i = pl.program_id(1)
    n_tiles = pl.num_programs(1)

    tile_r, wide = t_ref.shape
    ch = acc_sq.shape[0]              # chunk rows == accumulator rows
    n_chunks = tile_r // ch
    unroll = max(1, min(8, n_chunks))

    @pl.when(i == 0)
    def _():
        acc_sq[...] = jnp.zeros_like(acc_sq)
        acc_ab[...] = jnp.zeros_like(acc_ab)

    # Nominal (unclamped) first row this grid cell is responsible for.  For
    # clamped duplicate tiles this is >= valid_rows, so they contribute zero.
    row_base = (s * n_tiles + i) * tile_r

    def accumulate(row_limit):
        if row_limit is not None:
            row_iota = lax.broadcasted_iota(jnp.int32, (ch, wide), 0)

        def body(k, carry):
            ps, pa = carry
            r0 = pl.multiple_of(k * ch, ch)
            d = (t_ref[pl.ds(r0, ch), :].astype(jnp.float32)
                 - p_ref[pl.ds(r0, ch), :].astype(jnp.float32))
            if row_limit is not None:
                d = jnp.where((row_iota + r0) < row_limit, d, 0.0)
            return ps + d * d, pa + jnp.abs(d)

        zero = jnp.zeros((ch, wide), jnp.float32)
        ps, pa = lax.fori_loop(0, n_chunks, body, (zero, zero), unroll=unroll)
        acc_sq[...] += ps
        acc_ab[...] += pa

    if exact:
        # Geometry divides evenly: every tile is fully valid, no masking at all.
        accumulate(None)
    else:
        fully_valid = row_base + tile_r <= valid_rows
        in_bounds = row_base < valid_rows

        @pl.when(fully_valid)
        def _():
            accumulate(None)

        @pl.when(jnp.logical_and(jnp.logical_not(fully_valid), in_bounds))
        def _():
            accumulate(valid_rows - row_base)   # mask garbage tail of edge block
        # Fully out-of-range (clamped duplicate) tiles: contribute nothing.

    @pl.when(i == n_tiles - 1)
    def _():
        psq_ref[...] = acc_sq[...]
        pabs_ref[...] = acc_ab[...]


def mix_loss(target, predict, coefficients=None):
    """JAX/Pallas equivalent of Mix(losses={'mse','l1'}, coefficients).forward.

    Returns (loss, {'mse': mse, 'l1': l1}), matching the PyTorch module.
    """
    if coefficients is None:
        coefficients = {k: 1.0 for k in LOSS_NAMES}
    assert target.shape == predict.shape

    n_elem = math.prod(target.shape)
    t_flat = target.reshape(-1)
    p_flat = predict.reshape(-1)

    # Dtype-aware row granularity (handles mixed dtypes by taking the stricter).
    ch = max(_pack_rows(target.dtype), _pack_rows(predict.dtype))
    itemsize = max(jnp.dtype(target.dtype).itemsize,
                   jnp.dtype(predict.dtype).itemsize)

    # Lane width: largest of 512/256/128 that divides n_elem -> pad-free reshape.
    for wide in (4 * LANES, 2 * LANES, LANES):
        if n_elem % wide == 0:
            break
    else:
        wide = LANES

    rows = max(_cdiv(n_elem, wide), ch)
    padded = rows * wide
    pad = padded - n_elem
    if pad:
        # Only hit for tiny inputs or n_elem not divisible by 128; zero padding
        # contributes 0 to both partial sums (diff == 0), we divide by true n_elem.
        # TODO(synk): large tensors with n_elem % 128 != 0 still pay a padded copy.
        t_flat = jnp.pad(t_flat, (0, pad))
        p_flat = jnp.pad(p_flat, (0, pad))

    t2 = t_flat.reshape(rows, wide)
    p2 = p_flat.reshape(rows, wide)

    # Tile geometry: ~2 MiB per input per buffer, multiple of ch, never > rows.
    tile_cap = max(ch, (TILE_BYTES // (wide * itemsize)) // ch * ch)
    tile_r = min(tile_cap, (rows // ch) * ch)
    n_total = _cdiv(rows, tile_r)

    n_split = _num_splits()
    if n_total < 2:
        n_split = 1
    n_tiles = _cdiv(n_total, n_split)

    exact = (rows % tile_r == 0) and (n_total % n_split == 0)
    last_tile = n_total - 1

    def in_map(s, i):
        t_idx = s * n_tiles + i
        if not exact:
            # Clamp so every block start stays in bounds; the kernel masks the
            # duplicate by its *nominal* row range (zero contribution).
            t_idx = jnp.minimum(t_idx, last_tile)
        return (t_idx, 0)

    out_map = lambda s, i: (s, 0)

    kernel = partial(_mix_partials_kernel, valid_rows=rows, exact=exact)

    out_sq, out_abs = pl.pallas_call(
        kernel,
        out_shape=(
            jax.ShapeDtypeStruct((n_split * ch, wide), jnp.float32),
            jax.ShapeDtypeStruct((n_split * ch, wide), jnp.float32),
        ),
        grid_spec=pltpu.PrefetchScalarGridSpec(
            num_scalar_prefetch=0,
            grid=(n_split, n_tiles),
            in_specs=[
                pl.BlockSpec((tile_r, wide), in_map),
                pl.BlockSpec((tile_r, wide), in_map),
            ],
            out_specs=(
                pl.BlockSpec((ch, wide), out_map),
                pl.BlockSpec((ch, wide), out_map),
            ),
            scratch_shapes=[
                pltpu.VMEM((ch, wide), jnp.float32),
                pltpu.VMEM((ch, wide), jnp.float32),
            ]),
        compiler_params=pltpu.CompilerParams(
            dimension_semantics=("parallel", "arbitrary")),
    )(t2, p2)

    # Tiny epilogue: combine per-split partials, normalize by the true count, mix.
    mse = jnp.sum(out_sq) / n_elem
    l1 = jnp.sum(out_abs) / n_elem
    losses_results = {"mse": mse, "l1": l1}
    loss = sum(losses_results[k] * coefficients[k]
               for k in losses_results) / len(losses_results)
    return loss, losses_results


if __name__ == "__main__":
    key = jax.random.PRNGKey(0)
    k_t, k_p = jax.random.split(key)

    # NCHW, like the PyTorch usage (B=2, C=4, H=W=16) -> 2048 elements.
    target = jax.random.normal(k_t, (2, 4, 16, 16), dtype=jnp.float32)
    predict = jax.random.normal(k_p, (2, 4, 16, 16), dtype=jnp.float32)

    loss, parts = mix_loss(target, predict, coefficients=COEFFS)
    loss = jax.block_until_ready(loss)

    # Pure-JAX reference for the same Mix(MSE, L1) forward.
    diff = target - predict
    mse_ref = jnp.mean(diff * diff)
    l1_ref = jnp.mean(jnp.abs(diff))
    mix_ref = (mse_ref * COEFFS["mse"] + l1_ref * COEFFS["l1"]) / len(LOSS_NAMES)

    assert jnp.allclose(parts["mse"], mse_ref, rtol=1e-5, atol=1e-6)
    assert jnp.allclose(parts["l1"], l1_ref, rtol=1e-5, atol=1e-6)
    assert jnp.allclose(loss, mix_ref, rtol=1e-5, atol=1e-6)

    print("KERNEL_OK")
</pallas_src>

<mosaic_0001>
module attributes {stable_mosaic.version = 11 : i64} {
  func.func @_mix_partials_kernel(%arg0: i32, %arg1: i32, %arg2: memref<8x512xf32, #tpu.memory_space<vmem>>, %arg3: memref<8x512xf32, #tpu.memory_space<vmem>>, %arg4: memref<8x512xf32, #tpu.memory_space<vmem>>, %arg5: memref<8x512xf32, #tpu.memory_space<vmem>>, %arg6: memref<8x512xf32, #tpu.memory_space<vmem>>, %arg7: memref<8x512xf32, #tpu.memory_space<vmem>>) attributes {dimension_semantics = [#tpu.dimension_semantics<parallel>, #tpu.dimension_semantics<arbitrary>], iteration_bounds = array<i64: 1, 1>, scalar_prefetch = 0 : i64, scratch_operands = 2 : i64, tpu.core_type = #tpu.core_type<tc>, window_params = [{transform_indices = @transform_0, window_bounds = array<i64: 8, 512>}, {transform_indices = @transform_1, window_bounds = array<i64: 8, 512>}, {transform_indices = @transform_2, window_bounds = array<i64: 8, 512>}, {transform_indices = @transform_3, window_bounds = array<i64: 8, 512>}]} {
    %c0_i32 = arith.constant 0 : i32
    %0 = arith.cmpi eq, %arg1, %c0_i32 : i32
    %1 = arith.extui %0 : i1 to i32
    %c0_i32_0 = arith.constant 0 : i32
    %2 = arith.cmpi ne, %1, %c0_i32_0 : i32
    scf.if %2 {
      %cst_13 = arith.constant 0.000000e+00 : f32
      %24 = vector.broadcast %cst_13 : f32 to vector<8x512xf32>
      %c0_14 = arith.constant 0 : index
      %c0_15 = arith.constant 0 : index
      %25 = vector.load %arg6[%c0_14, %c0_15] : memref<8x512xf32, #tpu.memory_space<vmem>>, vector<8x512xf32>
      tpu.vector_store %arg6[%c0_14, %c0_15], %24 {strides = array<i32>} : memref<8x512xf32, #tpu.memory_space<vmem>>, vector<8x512xf32>,
      %cst_16 = arith.constant 0.000000e+00 : f32
      %26 = vector.broadcast %cst_16 : f32 to vector<8x512xf32>
      %c0_17 = arith.constant 0 : index
      %c0_18 = arith.constant 0 : index
      %27 = vector.load %arg7[%c0_17, %c0_18] : memref<8x512xf32, #tpu.memory_space<vmem>>, vector<8x512xf32>
      tpu.vector_store %arg7[%c0_17, %c0_18], %26 {strides = array<i32>} : memref<8x512xf32, #tpu.memory_space<vmem>>, vector<8x512xf32>,
    } else {
    }
    %cst = arith.constant 0.000000e+00 : f32
    %3 = vector.broadcast %cst : f32 to vector<8x512xf32>
    %c0_i32_1 = arith.constant 0 : i32
    %c8_i32 = arith.constant 8 : i32
    %4 = arith.muli %c0_i32_1, %c8_i32 : i32
    %5 = tpu.assume_multiple %4, 8 : i32
    %6 = arith.index_cast %5 : i32 to index
    %c0 = arith.constant 0 : index
    %7 = vector.load %arg2[%6, %c0] : memref<8x512xf32, #tpu.memory_space<vmem>>, vector<8x512xf32>
    %8 = arith.index_cast %5 : i32 to index
    %c0_2 = arith.constant 0 : index
    %9 = vector.load %arg3[%8, %c0_2] : memref<8x512xf32, #tpu.memory_space<vmem>>, vector<8x512xf32>
    %10 = arith.subf %7, %9 : vector<8x512xf32>
    %11 = arith.mulf %10, %10 : vector<8x512xf32>
    %12 = arith.addf %3, %11 : vector<8x512xf32>
    %13 = math.absf %10 : vector<8x512xf32>
    %14 = arith.addf %3, %13 : vector<8x512xf32>
    %c1_i32 = arith.constant 1 : i32
    %c0_3 = arith.constant 0 : index
    %c0_4 = arith.constant 0 : index
    %15 = vector.load %arg6[%c0_3, %c0_4] : memref<8x512xf32, #tpu.memory_space<vmem>>, vector<8x512xf32>
    %16 = arith.addf %15, %12 : vector<8x512xf32>
    %c0_5 = arith.constant 0 : index
    %c0_6 = arith.constant 0 : index
    %17 = vector.load %arg6[%c0_5, %c0_6] : memref<8x512xf32, #tpu.memory_space<vmem>>, vector<8x512xf32>
    tpu.vector_store %arg6[%c0_5, %c0_6], %16 {strides = array<i32>} : memref<8x512xf32, #tpu.memory_space<vmem>>, vector<8x512xf32>,
    %c0_7 = arith.constant 0 : index
    %c0_8 = arith.constant 0 : index
    %18 = vector.load %arg7[%c0_7, %c0_8] : memref<8x512xf32, #tpu.memory_space<vmem>>, vector<8x512xf32>
    %19 = arith.addf %18, %14 : vector<8x512xf32>
    %c0_9 = arith.constant 0 : index
    %c0_10 = arith.constant 0 : index
    %20 = vector.load %arg7[%c0_9, %c0_10] : memref<8x512xf32, #tpu.memory_space<vmem>>, vector<8x512xf32>
    tpu.vector_store %arg7[%c0_9, %c0_10], %19 {strides = array<i32>} : memref<8x512xf32, #tpu.memory_space<vmem>>, vector<8x512xf32>,
    %c0_i32_11 = arith.constant 0 : i32
    %21 = arith.cmpi eq, %arg1, %c0_i32_11 : i32
    %22 = arith.extui %21 : i1 to i32
    %c0_i32_12 = arith.constant 0 : i32
    %23 = arith.cmpi ne, %22, %c0_i32_12 : i32
    scf.if %23 {
      %c0_13 = arith.constant 0 : index
      %c0_14 = arith.constant 0 : index
      %24 = vector.load %arg6[%c0_13, %c0_14] : memref<8x512xf32, #tpu.memory_space<vmem>>, vector<8x512xf32>
      %c0_15 = arith.constant 0 : index
      %c0_16 = arith.constant 0 : index
      %25 = vector.load %arg4[%c0_15, %c0_16] : memref<8x512xf32, #tpu.memory_space<vmem>>, vector<8x512xf32>
      tpu.vector_store %arg4[%c0_15, %c0_16], %24 {strides = array<i32>} : memref<8x512xf32, #tpu.memory_space<vmem>>, vector<8x512xf32>,
      %c0_17 = arith.constant 0 : index
      %c0_18 = arith.constant 0 : index
      %26 = vector.load %arg7[%c0_17, %c0_18] : memref<8x512xf32, #tpu.memory_space<vmem>>, vector<8x512xf32>
      %c0_19 = arith.constant 0 : index
      %c0_20 = arith.constant 0 : index
      %27 = vector.load %arg5[%c0_19, %c0_20] : memref<8x512xf32, #tpu.memory_space<vmem>>, vector<8x512xf32>
      tpu.vector_store %arg5[%c0_19, %c0_20], %26 {strides = array<i32>} : memref<8x512xf32, #tpu.memory_space<vmem>>, vector<8x512xf32>,
    } else {
    }
    return
  }
  func.func @transform_0(%arg0: i32, %arg1: i32) -> (i32, i32) {
    %c1_i32 = arith.constant 1 : i32
    %0 = arith.muli %arg0, %c1_i32 : i32
    %1 = arith.addi %0, %arg1 : i32
    %c0_i32 = arith.constant 0 : i32
    %c0_i32_0 = arith.constant 0 : i32
    return %1, %c0_i32 : i32, i32
  }
  func.func @transform_1(%arg0: i32, %arg1: i32) -> (i32, i32) {
    %c1_i32 = arith.constant 1 : i32
    %0 = arith.muli %arg0, %c1_i32 : i32
    %1 = arith.addi %0, %arg1 : i32
    %c0_i32 = arith.constant 0 : i32
    %c0_i32_0 = arith.constant 0 : i32
    return %1, %c0_i32 : i32, i32
  }
  func.func @transform_2(%arg0: i32, %arg1: i32) -> (i32, i32) {
    %c0_i32 = arith.constant 0 : i32
    %c0_i32_0 = arith.constant 0 : i32
    return %arg0, %c0_i32 : i32, i32
  }
  func.func @transform_3(%arg0: i32, %arg1: i32) -> (i32, i32) {
    %c0_i32 = arith.constant 0 : i32
    %c0_i32_0 = arith.constant 0 : i32
    return %arg0, %c0_i32 : i32, i32
  }
}

</mosaic_0001>

<llo_original>
// kernel: tpu_custom_call.1
$region0: #{tpu_custom_call.1}
  #allocation0 [shape = 'u32[]', space=smem, size = 0x4, offset = 0x4, fixed_abs, tag = 'smem constant byte address 0x4 - core index']
  #allocation1 [shape = 'u32[144,128]{1,0:T(1,128)}', space=vmem, size = 0x12000, scoped, tag = 'internal scratch']
  #allocation2 [shape = 'f32[8,512]{1,0:T(8,128)}', space=vmem, size = 0x4000, scoped, tag = 'scratch operand']
  #allocation3 [shape = 'f32[8,512]{1,0:T(8,128)}', space=vmem, size = 0x4000, scoped, tag = 'scratch operand']
  %s0 = inlined_call_operand.hbm [shape: f32[8,512], index: 0, kind: input, shape index: {}]
  %s1 = inlined_call_operand.hbm [shape: f32[8,512], index: 1, kind: input, shape index: {}]
  %s2 = inlined_call_operand.hbm [shape: f32[8,512], index: 2, kind: output, shape index: {0}]
  %s3 = inlined_call_operand.hbm [shape: f32[8,512], index: 3, kind: output, shape index: {1}]
  %4 = xla_tuple %s2, %s3
  %s5 = sld [smem:[#allocation0]]
  $region42: #{tpu_custom_call.1} parent=0
    _
  %s7 = ssub.s32 1, %s5
  %s8 = scalar_select 0, %s7, %s5
  $region1: #{tpu_custom_call.1} parent=0
    #allocation4 [shape = 'u8[16384]{0}', space=vmem, size = 0x4000, scoped, tag = 'input window, operand 0, single buffered']
    #allocation5 [shape = 's32[1]{0}', space=sflag, size = 0x4, scoped, tag = 'scoped memory for tpu_custom_call.1']
    #allocation6 [shape = 's32[1]{0}', space=sflag, size = 0x4, scoped, tag = 'scoped memory for tpu_custom_call.1']
    #allocation7 [shape = 'u8[16384]{0}', space=vmem, size = 0x4000, scoped, tag = 'input window, operand 1, single buffered']
    #allocation8 [shape = 's32[1]{0}', space=sflag, size = 0x4, scoped, tag = 'scoped memory for tpu_custom_call.1']
    #allocation9 [shape = 'u8[16384]{0}', space=vmem, size = 0x4000, scoped, tag = 'output window, operand 0, single buffered']
    #allocation10 [shape = 'u8[16384]{0}', space=vmem, size = 0x4000, scoped, tag = 'output window, operand 1, single buffered']
    #allocation11 [shape = 's32[1]{0}', space=sflag, size = 0x4, scoped, tag = 'scoped memory for tpu_custom_call.1']
    %9 = vsyncpa [#allocation5], 0
    %10 = vsyncpa [#allocation8], 0
    %11 = vsyncpa [#allocation6], 0
    %12 = vsyncpa [#allocation11], 0
    // Predicated region
    $region2: #{tpu_custom_call.1} parent=1 // pred_check
      _
    $region3: #{tpu_custom_call.1} parent=1 // pred_check_branch
      %14 = sbr.rel (0) target = $region5
    $region4: #{tpu_custom_call.1} parent=1 // pred_region
      %s15 = sadd.s32 0, 0
      %s17 = ssub.s32 512, 512
      %18 = vsyncadd [#allocation5], %s17
      %s19 = smul.addr %s15, 4
      %s20 = smul.addr %s19, 128
      %s21 = scalar_lea.hbm %s0, %s20
      %s23 = sshll.u32 [#allocation4], 4
      %s24 = int_to_ptr.vmem [resolvable:$true] %s23
      %26 = dma.hbm_to_vmem [thread:$0]  %s21, 512, %s24, [#allocation5]
    $region5: #{tpu_custom_call.1} parent=1 // pred_fallthru
      _
    // Predicated region
    $region6: #{tpu_custom_call.1} parent=1 // pred_check
      _
    $region7: #{tpu_custom_call.1} parent=1 // pred_check_branch
      %28 = sbr.rel (0) target = $region9
    $region8: #{tpu_custom_call.1} parent=1 // pred_region
      %s29 = sadd.s32 0, 0
      %s31 = ssub.s32 512, 512
      %32 = vsyncadd [#allocation8], %s31
      %s33 = smul.addr %s29, 4
      %s34 = smul.addr %s33, 128
      %s35 = scalar_lea.hbm %s1, %s34
      %s37 = sshll.u32 [#allocation7], 4
      %s38 = int_to_ptr.vmem [resolvable:$true] %s37
      %40 = dma.hbm_to_vmem [thread:$0]  %s35, 512, %s38, [#allocation8]
    $region9: #{tpu_custom_call.1} parent=1 // pred_fallthru
      _
    // Predicated region
    $region10: #{tpu_custom_call.1} parent=1 // pred_check
      _
    $region11: #{tpu_custom_call.1} parent=1 // pred_check_branch
      %42 = sbr.rel (0) target = $region13
    $region12: #{tpu_custom_call.1} parent=1 // pred_region
      %43 = dma.done [#allocation5], 512
    $region13: #{tpu_custom_call.1} parent=1 // pred_fallthru
      _
    // Predicated region
    $region14: #{tpu_custom_call.1} parent=1 // pred_check
      _
    $region15: #{tpu_custom_call.1} parent=1 // pred_check_branch
      %45 = sbr.rel (0) target = $region17
    $region16: #{tpu_custom_call.1} parent=1 // pred_region
      %46 = dma.done [#allocation8], 512
    $region17: #{tpu_custom_call.1} parent=1 // pred_fallthru
      _
    %s47 = sadd.s32 0, 0
    %s48 = sadd.s32 0, 0
    %p49 = scmp.eq.s32.totalorder 0, 0
    // Predicated region
    $region18: #{tpu_custom_call.1} parent=1 // pred_check
      %p50 = pneg %p49
    $region19: #{tpu_custom_call.1} parent=1 // pred_check_branch
      %52 = sbr.rel (%p50) target = $region21
    $region20: #{tpu_custom_call.1} parent=1 // pred_region
      %53 = vst [vmem:[#allocation2] sm:$0xff] 0.0
      %54 = vst [vmem:[#allocation2 + $0x8] sm:$0xff] 0.0
      %55 = vst [vmem:[#allocation2 + $0x10] sm:$0xff] 0.0
      %56 = vst [vmem:[#allocation2 + $0x18] sm:$0xff] 0.0
      %57 = vst [vmem:[#allocation3] sm:$0xff] 0.0
      %58 = vst [vmem:[#allocation3 + $0x8] sm:$0xff] 0.0
      %59 = vst [vmem:[#allocation3 + $0x10] sm:$0xff] 0.0
      %60 = vst [vmem:[#allocation3 + $0x18] sm:$0xff] 0.0
    $region21: #{tpu_custom_call.1} parent=1 // pred_fallthru
      _
    %s61 = smul.u32 0, 4
    %s62 = smul.addr %s61, 8
    %s63 = scalar_lea.vmem [#allocation4], %s62
    %v64 = vld [vmem:[%s63] sm:$0xff]
    %v65 = vld [vmem:[%s63 + $0x8] sm:$0xff]
    %v66 = vld [vmem:[%s63 + $0x10] sm:$0xff]
    %v67 = vld [vmem:[%s63 + $0x18] sm:$0xff]
    %s68 = smul.addr %s61, 8
    %s69 = scalar_lea.vmem [#allocation7], %s68
    %v70 = vld [vmem:[%s69] sm:$0xff]
    %v71 = vld [vmem:[%s69 + $0x8] sm:$0xff]
    %v72 = vld [vmem:[%s69 + $0x10] sm:$0xff]
    %v73 = vld [vmem:[%s69 + $0x18] sm:$0xff]
    %v74 = vsub.f32 %v64, %v70
    %v75 = vsub.f32 %v65, %v71
    %v76 = vsub.f32 %v66, %v72
    %v77 = vsub.f32 %v67, %v73
    %v78 = vmul.f32 %v74, %v74
    %v79 = vmul.f32 %v75, %v75
    %v80 = vmul.f32 %v76, %v76
    %v81 = vmul.f32 %v77, %v77
    %v82 = vadd.f32 %v78, 0.0
    %v83 = vadd.f32 %v79, 0.0
    %v84 = vadd.f32 %v80, 0.0
    %v85 = vadd.f32 %v81, 0.0
    %v86 = vand.u32 2147483647, %v74
    %v87 = vand.u32 2147483647, %v75
    %v88 = vand.u32 2147483647, %v76
    %v89 = vand.u32 2147483647, %v77
    %v90 = vadd.f32 %v86, 0.0
    %v91 = vadd.f32 %v87, 0.0
    %v92 = vadd.f32 %v88, 0.0
    %v93 = vadd.f32 %v89, 0.0
    %v94 = vld [vmem:[#allocation2] sm:$0xff]
    %v95 = vld [vmem:[#allocation2 + $0x8] sm:$0xff]
    %v96 = vld [vmem:[#allocation2 + $0x10] sm:$0xff]
    %v97 = vld [vmem:[#allocation2 + $0x18] sm:$0xff]
    %v98 = vadd.f32 %v94, %v82
    %v99 = vadd.f32 %v95, %v83
    %v100 = vadd.f32 %v96, %v84
    %v101 = vadd.f32 %v97, %v85
    %102 = vst [vmem:[#allocation2] sm:$0xff] %v98
    %103 = vst [vmem:[#allocation2 + $0x8] sm:$0xff] %v99
    %104 = vst [vmem:[#allocation2 + $0x10] sm:$0xff] %v100
    %105 = vst [vmem:[#allocation2 + $0x18] sm:$0xff] %v101
    %v106 = vld [vmem:[#allocation3] sm:$0xff]
    %v107 = vld [vmem:[#allocation3 + $0x8] sm:$0xff]
    %v108 = vld [vmem:[#allocation3 + $0x10] sm:$0xff]
    %v109 = vld [vmem:[#allocation3 + $0x18] sm:$0xff]
    %v110 = vadd.f32 %v106, %v90
    %v111 = vadd.f32 %v107, %v91
    %v112 = vadd.f32 %v108, %v92
    %v113 = vadd.f32 %v109, %v93
    %114 = vst [vmem:[#allocation3] sm:$0xff] %v110
    %115 = vst [vmem:[#allocation3 + $0x8] sm:$0xff] %v111
    %116 = vst [vmem:[#allocation3 + $0x10] sm:$0xff] %v112
    %117 = vst [vmem:[#allocation3 + $0x18] sm:$0xff] %v113
    // Predicated region
    $region22: #{tpu_custom_call.1} parent=1 // pred_check
      %p118 = pneg %p49
    $region23: #{tpu_custom_call.1} parent=1 // pred_check_branch
      %120 = sbr.rel (%p118) target = $region25
    $region24: #{tpu_custom_call.1} parent=1 // pred_region
      %v121 = vld [vmem:[#allocation2] sm:$0xff]
      %v122 = vld [vmem:[#allocation2 + $0x8] sm:$0xff]
      %v123 = vld [vmem:[#allocation2 + $0x10] sm:$0xff]
      %v124 = vld [vmem:[#allocation2 + $0x18] sm:$0xff]
      %125 = vst [vmem:[#allocation9] sm:$0xff] %v121
      %126 = vst [vmem:[#allocation9 + $0x8] sm:$0xff] %v122
      %127 = vst [vmem:[#allocation9 + $0x10] sm:$0xff] %v123
      %128 = vst [vmem:[#allocation9 + $0x18] sm:$0xff] %v124
      %v129 = vld [vmem:[#allocation3] sm:$0xff]
      %v130 = vld [vmem:[#allocation3 + $0x8] sm:$0xff]
      %v131 = vld [vmem:[#allocation3 + $0x10] sm:$0xff]
      %v132 = vld [vmem:[#allocation3 + $0x18] sm:$0xff]
      %133 = vst [vmem:[#allocation10] sm:$0xff] %v129
      %134 = vst [vmem:[#allocation10 + $0x8] sm:$0xff] %v130
      %135 = vst [vmem:[#allocation10 + $0x10] sm:$0xff] %v131
      %136 = vst [vmem:[#allocation10 + $0x18] sm:$0xff] %v132
    $region25: #{tpu_custom_call.1} parent=1 // pred_fallthru
      _
    // Predicated region
    $region26: #{tpu_custom_call.1} parent=1 // pred_check
      _
    $region27: #{tpu_custom_call.1} parent=1 // pred_check_branch
      %138 = sbr.rel (0) target = $region29
    $region28: #{tpu_custom_call.1} parent=1 // pred_region
      %s140 = ssub.s32 512, 512
      %141 = vsyncadd [#allocation6], %s140
      %s143 = sshll.u32 [#allocation9], 4
      %s144 = int_to_ptr.vmem [resolvable:$true] %s143
      %146 = dma.vmem_to_hbm [thread:$0]  %s144, 512, %s2, [#allocation6]
    $region29: #{tpu_custom_call.1} parent=1 // pred_fallthru
      _
    // Predicated region
    $region30: #{tpu_custom_call.1} parent=1 // pred_check
      _
    $region31: #{tpu_custom_call.1} parent=1 // pred_check_branch
      %148 = sbr.rel (0) target = $region33
    $region32: #{tpu_custom_call.1} parent=1 // pred_region
      %s150 = ssub.s32 512, 512
      %151 = vsyncadd [#allocation11], %s150
      %s153 = sshll.u32 [#allocation10], 4
      %s154 = int_to_ptr.vmem [resolvable:$true] %s153
      %156 = dma.vmem_to_hbm [thread:$0]  %s154, 512, %s3, [#allocation11]
    $region33: #{tpu_custom_call.1} parent=1 // pred_fallthru
      _
    // Predicated region
    $region34: #{tpu_custom_call.1} parent=1 // pred_check
      _
    $region35: #{tpu_custom_call.1} parent=1 // pred_check_branch
      %158 = sbr.rel (0) target = $region37
    $region36: #{tpu_custom_call.1} parent=1 // pred_region
      %159 = dma.done [#allocation6], 512
    $region37: #{tpu_custom_call.1} parent=1 // pred_fallthru
      _
    // Predicated region
    $region38: #{tpu_custom_call.1} parent=1 // pred_check
      _
    $region39: #{tpu_custom_call.1} parent=1 // pred_check_branch
      %161 = sbr.rel (0) target = $region41
    $region40: #{tpu_custom_call.1} parent=1 // pred_region
      %162 = dma.done [#allocation11], 512
    $region41: #{tpu_custom_call.1} parent=1 // pred_fallthru
      _
    %163 = vsyncpa [#allocation5], 1
    %164 = vsyncpa [#allocation8], 1
    %165 = vsyncpa [#allocation6], 1
    %166 = vsyncpa [#allocation11], 1

</llo_original>
